<compile_context>
chip_gen: v6e
topology: v6e:2x2x1
jax: 0.10.0
libtpu: 0.0.40
codegen_flags: <defaults>
</compile_context>

<pallas_src>
import functools

import numpy as np
import jax
import jax.numpy as jnp
from jax.experimental import pallas as pl
from jax.experimental.pallas import tpu as pltpu

FACTORS = [1, 1, 1, 1, 1 / 2, 1 / 4, 1 / 8, 1 / 16, 1 / 32]
LEAKY_SLOPE = 0.2


def _leaky(x):
    return jnp.where(x >= 0, x, LEAKY_SLOPE * x)


# ------------------------------ Pallas kernels ------------------------------

def _conv1x1_lrelu_kernel(x_ref, w_ref, b_ref, o_ref):
    # x: (M, Cin)  w: (Cin, Cout) pre-scaled  b: (1, Cout)  ->  leaky(x @ w + b)
    y = jnp.dot(x_ref[...], w_ref[...], preferred_element_type=jnp.float32)
    o_ref[...] = _leaky(y + b_ref[...])


def _conv3x3_kernel(*refs, H, W, cin, cout, do_pool, do_fade):
    # WSConv2d(3x3, pad=1) + LeakyReLU(0.2), optionally fused with 2x2 avg-pool
    # (expressed as a matmul against a constant pooling matrix) and fade_in.
    refs = list(refs)
    x_ref = refs.pop(0)                       # (1, H, W, Cin)
    w_ref = refs.pop(0)                       # (9*Cin, Cout), pre-scaled
    b_ref = refs.pop(0)                       # (1, Cout)
    pool_ref = refs.pop(0) if do_pool else None   # (H*W/4, H*W)
    alpha_ref = refs.pop(0) if do_fade else None  # (1,) in SMEM
    down_ref = refs.pop(0) if do_fade else None   # (1, H*W/4, Cout)
    o_ref = refs.pop(0)                       # (1, Hout*Wout, Cout)
    col_ref = refs.pop(0)                     # VMEM scratch (H, W, 9*Cin)

    # Build the im2col slab once per tile: K axis folds (tap, cin) -> 9*Cin so
    # the MXU sees one wide contraction instead of 9 narrow K=Cin dots.
    # Border taps that fall in the (zero) halo simply stay zero in the slab.
    col_ref[...] = jnp.zeros(col_ref.shape, col_ref.dtype)
    t = 0
    for dy in range(3):
        for dx in range(3):
            oy, ox = dy - 1, dx - 1
            h0, h1 = max(0, -oy), min(H, H - oy)
            w0, w1 = max(0, -ox), min(W, W - ox)
            col_ref[h0:h1, w0:w1, t * cin:(t + 1) * cin] = (
                x_ref[0, h0 + oy:h1 + oy, w0 + ox:w1 + ox, :])
            t += 1

    slab = col_ref[...].reshape(H * W, 9 * cin)          # lane dim unchanged
    y = jnp.dot(slab, w_ref[...], preferred_element_type=jnp.float32)
    y = _leaky(y + b_ref[...])                            # (H*W, Cout)

    if do_pool:
        # 2x2 average pool == constant (H*W/4, H*W) matrix applied on the left.
        y = jnp.dot(pool_ref[...], y, preferred_element_type=jnp.float32)
    if do_fade:
        a = alpha_ref[0]
        y = a * y + (1.0 - a) * down_ref[0]
    o_ref[0] = y


def _final_head_kernel(x_ref, w4_ref, b4_ref, w1_ref, b1_ref, o_ref):
    # final_block tail, whole batch in one call:
    #   WSConv2d(C, C, 4x4, valid) on a 4x4 map  == (B, 16C) @ (16C, C)
    #   -> LeakyReLU -> WSConv2d(C, 1, 1x1)      == (B, C) @ (C, 1)
    h = jnp.dot(x_ref[...], w4_ref[...], preferred_element_type=jnp.float32)
    h = _leaky(h + b4_ref[...])
    o_ref[...] = jnp.dot(h, w1_ref[...],
                         preferred_element_type=jnp.float32) + b1_ref[...]


# --------------------------------- wrappers ---------------------------------

@functools.lru_cache(maxsize=None)
def _pool_matrix(H, W):
    # Constant 2x2 average-pooling matrix for an (H, W) map flattened row-major.
    Ho, Wo = H // 2, W // 2
    P = np.zeros((Ho * Wo, H * W), np.float32)
    for h in range(Ho):
        for w in range(Wo):
            r = h * Wo + w
            for i in range(2):
                for j in range(2):
                    P[r, (2 * h + i) * W + (2 * w + j)] = 0.25
    return jnp.asarray(P)


def ws_conv1x1_lrelu(x, p):
    # x: (B, H, W, Cin) NHWC.  Whole batch flattened into one matmul call.
    B, H, W, cin = x.shape
    cout = p["b"].shape[1]
    M = B * H * W
    xf = x.reshape(M, cin)
    out = pl.pallas_call(
        _conv1x1_lrelu_kernel,
        out_shape=jax.ShapeDtypeStruct((M, cout), jnp.float32),
        grid=(1,),
        in_specs=[
            pl.BlockSpec((M, cin), lambda i: (0, 0)),
            pl.BlockSpec((cin, cout), lambda i: (0, 0)),
            pl.BlockSpec((1, cout), lambda i: (0, 0)),
        ],
        out_specs=pl.BlockSpec((M, cout), lambda i: (0, 0)),
    )(xf, p["w"], p["b"])
    return out.reshape(B, H, W, cout)


def ws_conv3x3_lrelu(x, p, *, pool=False, fade=None):
    # x: (B, H, W, Cin) NHWC; p["w"]: (9*Cin, Cout) pre-scaled; p["b"]: (1, Cout)
    # TODO(synk): at production ProGAN sizes (Cin<=512, H<=1024) add spatial row
    # tiling (grid=(B, H_tiles)) with halo DMA; whole-image blocks are fine at
    # the demo resolutions used here.
    B, H, W, cin = x.shape
    cout = p["b"].shape[1]
    do_fade = fade is not None
    do_pool = bool(pool)
    if do_fade:
        assert do_pool, "fade_in is only used after the pooled conv"
    Ho, Wo = (H // 2, W // 2) if do_pool else (H, W)

    kern = functools.partial(_conv3x3_kernel, H=H, W=W, cin=cin, cout=cout,
                             do_pool=do_pool, do_fade=do_fade)

    in_specs = [
        pl.BlockSpec((1, H, W, cin), lambda i: (i, 0, 0, 0)),
        pl.BlockSpec((9 * cin, cout), lambda i: (0, 0)),   # constant index_map
        pl.BlockSpec((1, cout), lambda i: (0, 0)),
    ]
    args = [x, p["w"], p["b"]]
    if do_pool:
        P = _pool_matrix(H, W)
        in_specs.append(pl.BlockSpec((Ho * Wo, H * W), lambda i: (0, 0)))
        args.append(P)
    if do_fade:
        alpha, down = fade
        in_specs.append(pl.BlockSpec(memory_space=pltpu.MemorySpace.SMEM))
        args.append(jnp.asarray(alpha, jnp.float32).reshape(1))
        in_specs.append(pl.BlockSpec((1, Ho * Wo, cout), lambda i: (i, 0, 0)))
        args.append(down.reshape(B, Ho * Wo, cout))

    # Explicit VMEM budget from the actual block sizes (double-buffered blocks
    # + im2col scratch) so the default scoped limit is never the constraint.
    f32 = 4
    blk = (H * W * cin + 9 * cin * cout + cout + Ho * Wo * cout) * f32
    if do_pool:
        blk += Ho * Wo * H * W * f32
    if do_fade:
        blk += Ho * Wo * cout * f32
    col = H * W * 9 * cin * f32
    vmem_limit = int(min(64 << 20, max(8 << 20, 4 * blk + col)))

    out = pl.pallas_call(
        kern,
        out_shape=jax.ShapeDtypeStruct((B, Ho * Wo, cout), jnp.float32),
        grid=(B,),
        in_specs=in_specs,
        out_specs=pl.BlockSpec((1, Ho * Wo, cout), lambda i: (i, 0, 0)),
        scratch_shapes=[pltpu.VMEM((H, W, 9 * cin), jnp.float32)],
        compiler_params=pltpu.CompilerParams(
            dimension_semantics=("parallel",),
            vmem_limit_bytes=vmem_limit,
        ),
    )(*args)
    return out.reshape(B, Ho, Wo, cout)


def final_head(x_flat, p4, p1):
    # x_flat: (B, 16*C) -- NHWC flatten of the 4x4 feature map.
    B, K = x_flat.shape
    C = p4["b"].shape[1]
    return pl.pallas_call(
        _final_head_kernel,
        out_shape=jax.ShapeDtypeStruct((B, 1), jnp.float32),
        grid=(1,),
        in_specs=[
            pl.BlockSpec((B, K), lambda i: (0, 0)),
            pl.BlockSpec((K, C), lambda i: (0, 0)),
            pl.BlockSpec((1, C), lambda i: (0, 0)),
            pl.BlockSpec((C, 1), lambda i: (0, 0)),
            pl.BlockSpec((1, 1), lambda i: (0, 0)),
        ],
        out_specs=pl.BlockSpec((B, 1), lambda i: (0, 0)),
    )(x_flat, p4["w"], p4["b"], p1["w"], p1["b"])


# ----------------------------- parameter creation ----------------------------

def _ws_conv_params(key, cin, cout, k, gain=2.0):
    # PyTorch WSConv2d: weight ~ N(0,1), bias = 0, and forward does
    # conv(x * scale) + b with scale = sqrt(gain / (cin*k*k)).  The conv is
    # linear, so fold scale into the weight once here (one fewer VPU multiply
    # per kernel call).  Weight stored as (k, k, Cin, Cout) flattened to
    # (k*k*Cin, Cout) with (kh, kw, cin) K-ordering to match the im2col slab.
    scale = (gain / (cin * k * k)) ** 0.5
    w = jax.random.normal(key, (k, k, cin, cout), jnp.float32) * scale
    w = w.reshape(k * k * cin, cout) if k > 1 else w.reshape(cin, cout)
    return {"w": w, "b": jnp.zeros((1, cout), jnp.float32)}


def init_params(key, in_channels, img_channels=3, num_class=10):
    n = len(FACTORS) - 1                       # number of prog_blocks (8)
    ki = iter(jax.random.split(key, 3 * n + 5))
    params = {"emb": jax.random.normal(next(ki), (num_class, num_class),
                                       jnp.float32)}
    blocks, rgb = [], []
    for i in range(n, 0, -1):                  # i = 8 .. 1 (matches the module)
        cin = int(in_channels * FACTORS[i])
        cout = int(in_channels * FACTORS[i - 1])
        blocks.append({"c1": _ws_conv_params(next(ki), cin, cout, 3),
                       "c2": _ws_conv_params(next(ki), cout, cout, 3)})
        rgb.append(_ws_conv_params(next(ki), img_channels + num_class, cin, 1))
    rgb.append(_ws_conv_params(next(ki), img_channels + num_class,
                               in_channels, 1))            # initial_rgb
    params["blocks"] = blocks
    params["rgb"] = rgb
    params["final"] = {
        "c3x3": _ws_conv_params(next(ki), in_channels + 1, in_channels, 3),
        "c4x4": _ws_conv_params(next(ki), in_channels, in_channels, 4),
        "c1x1": _ws_conv_params(next(ki), in_channels, 1, 1),
    }
    return params


# -------------------------------- forward pass -------------------------------

def _avg_pool2_nhwc(x):
    B, H, W, C = x.shape
    return x.reshape(B, H // 2, 2, W // 2, 2, C).mean(axis=(2, 4))


def discriminator_forward(params, x, labels, alpha, steps):
    # x: (B, img_channels, H, W) NCHW with H = W = 4 * 2**steps; labels: (B,)
    B, _, H, W = x.shape
    num_class = params["emb"].shape[1]
    n_blocks = len(params["blocks"])
    cur = n_blocks - steps

    # label embedding broadcast + channel concat (tiny JAX glue)
    c = params["emb"][labels]                              # (B, num_class)
    x_nhwc = jnp.transpose(x, (0, 2, 3, 1))
    c_map = jnp.broadcast_to(c[:, None, None, :], (B, H, W, num_class))
    xin = jnp.concatenate([x_nhwc, c_map], axis=-1)        # (B,H,W,3+num_class)

    out = ws_conv1x1_lrelu(xin, params["rgb"][cur])        # fromRGB + leaky

    if steps > 0:
        # downscaled branch: avg_pool(x) -> fromRGB -> leaky
        down = ws_conv1x1_lrelu(_avg_pool2_nhwc(xin), params["rgb"][cur + 1])
        blk = params["blocks"][cur]
        out = ws_conv3x3_lrelu(out, blk["c1"])
        # conv2 + leaky + 2x2 avg-pool + fade_in fused in one kernel
        out = ws_conv3x3_lrelu(out, blk["c2"], pool=True, fade=(alpha, down))
        for step in range(cur + 1, n_blocks):
            blk = params["blocks"][step]
            out = ws_conv3x3_lrelu(out, blk["c1"])
            out = ws_conv3x3_lrelu(out, blk["c2"], pool=True)   # pool fused

    # minibatch std feature: unbiased std over batch, mean -> scalar channel
    s = jnp.mean(jnp.std(out, axis=0, ddof=1))
    out = jnp.concatenate(
        [out, jnp.broadcast_to(s, out.shape[:-1] + (1,))], axis=-1)

    out = ws_conv3x3_lrelu(out, params["final"]["c3x3"])   # (B,4,4,C) + leaky
    flat = out.reshape(B, -1)                              # (B, 16*C)
    return final_head(flat, params["final"]["c4x4"], params["final"]["c1x1"])


# ------------------------------------ main -----------------------------------

if __name__ == "__main__":
    key = jax.random.PRNGKey(0)
    in_channels, img_channels, num_class = 32, 3, 10
    B, steps, alpha = 2, 2, 0.5
    res = 4 * (2 ** steps)                                 # 16x16 input

    kp, kx, kl = jax.random.split(key, 3)
    params = init_params(kp, in_channels, img_channels, num_class)
    x = jax.random.normal(kx, (B, img_channels, res, res), jnp.float32)
    labels = jax.random.randint(kl, (B,), 0, num_class)

    y = discriminator_forward(params, x, labels, alpha, steps)
    y = jax.block_until_ready(y)

    assert y.shape == (B, 1), y.shape
    assert bool(jnp.all(jnp.isfinite(y)))
    print("KERNEL_OK")
</pallas_src>

<mosaic_0001>
module attributes {stable_mosaic.version = 11 : i64} {
  func.func @_conv1x1_lrelu_kernel(%arg0: i32, %arg1: memref<512x13xf32, #tpu.memory_space<vmem>>, %arg2: memref<13x32xf32, #tpu.memory_space<vmem>>, %arg3: memref<1x32xf32, #tpu.memory_space<vmem>>, %arg4: memref<512x32xf32, #tpu.memory_space<vmem>>) attributes {dimension_semantics = [#tpu.dimension_semantics<arbitrary>], iteration_bounds = array<i64: 1>, scalar_prefetch = 0 : i64, scratch_operands = 0 : i64, tpu.core_type = #tpu.core_type<tc>, window_params = [{pipeline_mode = #tpu.pipeline_mode<synchronous>, transform_indices = @transform_0, window_bounds = array<i64: 512, 13>}, {pipeline_mode = #tpu.pipeline_mode<synchronous>, transform_indices = @transform_1, window_bounds = array<i64: 13, 32>}, {pipeline_mode = #tpu.pipeline_mode<synchronous>, transform_indices = @transform_2, window_bounds = array<i64: 1, 32>}, {pipeline_mode = #tpu.pipeline_mode<synchronous>, transform_indices = @transform_3, window_bounds = array<i64: 512, 32>}]} {
    %c0 = arith.constant 0 : index
    %c0_0 = arith.constant 0 : index
    %0 = vector.load %arg1[%c0, %c0_0] : memref<512x13xf32, #tpu.memory_space<vmem>>, vector<512x13xf32>
    %c0_1 = arith.constant 0 : index
    %c0_2 = arith.constant 0 : index
    %1 = vector.load %arg2[%c0_1, %c0_2] : memref<13x32xf32, #tpu.memory_space<vmem>>, vector<13x32xf32>
    %cst = arith.constant dense<0.000000e+00> : vector<512x32xf32>
    %2 = tpu.matmul %0, %1, %cst {dimension_numbers = #tpu.dot_dimension_numbers<[1], [0], [0], [1], [0, 0, 1, 1], [], []>} : vector<512x13xf32>, vector<13x32xf32>, vector<512x32xf32> -> vector<512x32xf32>
    %c0_3 = arith.constant 0 : index
    %c0_4 = arith.constant 0 : index
    %3 = vector.load %arg3[%c0_3, %c0_4] : memref<1x32xf32, #tpu.memory_space<vmem>>, vector<1x32xf32>
    %4 = vector.broadcast %3 : vector<1x32xf32> to vector<512x32xf32>
    %5 = arith.addf %2, %4 : vector<512x32xf32>
    %cst_5 = arith.constant 0.000000e+00 : f32
    %6 = vector.broadcast %cst_5 : f32 to vector<512x32xf32>
    %7 = arith.cmpf oge, %5, %6 : vector<512x32xf32>
    %cst_6 = arith.constant 2.000000e-01 : f32
    %8 = vector.broadcast %cst_6 : f32 to vector<512x32xf32>
    %9 = arith.mulf %8, %5 : vector<512x32xf32>
    %10 = arith.select %7, %5, %9 : vector<512x32xi1>, vector<512x32xf32>
    %c0_7 = arith.constant 0 : index
    %c0_8 = arith.constant 0 : index
    %11 = vector.load %arg4[%c0_7, %c0_8] : memref<512x32xf32, #tpu.memory_space<vmem>>, vector<512x32xf32>
    tpu.vector_store %arg4[%c0_7, %c0_8], %10 {strides = array<i32>} : memref<512x32xf32, #tpu.memory_space<vmem>>, vector<512x32xf32>,
    return
  }
  func.func @transform_0(%arg0: i32) -> (i32, i32) {
    %c0_i32 = arith.constant 0 : i32
    %c0_i32_0 = arith.constant 0 : i32
    %c0_i32_1 = arith.constant 0 : i32
    return %c0_i32, %c0_i32_0 : i32, i32
  }
  func.func @transform_1(%arg0: i32) -> (i32, i32) {
    %c0_i32 = arith.constant 0 : i32
    %c0_i32_0 = arith.constant 0 : i32
    %c0_i32_1 = arith.constant 0 : i32
    return %c0_i32, %c0_i32_0 : i32, i32
  }
  func.func @transform_2(%arg0: i32) -> (i32, i32) {
    %c0_i32 = arith.constant 0 : i32
    %c0_i32_0 = arith.constant 0 : i32
    %c0_i32_1 = arith.constant 0 : i32
    return %c0_i32, %c0_i32_0 : i32, i32
  }
  func.func @transform_3(%arg0: i32) -> (i32, i32) {
    %c0_i32 = arith.constant 0 : i32
    %c0_i32_0 = arith.constant 0 : i32
    %c0_i32_1 = arith.constant 0 : i32
    return %c0_i32, %c0_i32_0 : i32, i32
  }
}

</mosaic_0001>

<llo_original>
// kernel: tpu_custom_call.1
$region0: #{tpu_custom_call.1}
  #allocation0 [shape = 'u32[]', space=smem, size = 0x4, offset = 0x4, fixed_abs, tag = 'smem constant byte address 0x4 - core index']
  #allocation1 [shape = 'u32[144,128]{1,0:T(1,128)}', space=vmem, size = 0x12000, scoped, tag = 'internal scratch']
  %s0 = inlined_call_operand.vmem [shape: f32[512,13], index: 0, kind: input, shape index: {}]
  %s1 = inlined_call_operand.vmem [shape: f32[13,32], index: 1, kind: input, shape index: {}]
  %s2 = inlined_call_operand.vmem [shape: f32[1,32], index: 2, kind: input, shape index: {}]
  %s3 = inlined_call_operand.vmem [shape: f32[512,32], index: 3, kind: output, shape index: {}]
  %s4 = sld [smem:[#allocation0]]
  $region22: #{tpu_custom_call.1} parent=0
    _
  %s6 = ssub.s32 1, %s4
  %s7 = scalar_select 0, %s6, %s4
  // Predicated region
  $region2: #{tpu_custom_call.1} parent=0 // pred_check
    _
  $region3: #{tpu_custom_call.1} parent=0 // pred_check_branch
    %9 = sbr.rel (0) target = $region5
  $region4: #{tpu_custom_call.1} parent=0 // pred_region
    _
  $region5: #{tpu_custom_call.1} parent=0 // pred_fallthru
    _
  // Predicated region
  $region6: #{tpu_custom_call.1} parent=0 // pred_check
    _
  $region7: #{tpu_custom_call.1} parent=0 // pred_check_branch
    %11 = sbr.rel (0) target = $region9
  $region8: #{tpu_custom_call.1} parent=0 // pred_region
    _
  $region9: #{tpu_custom_call.1} parent=0 // pred_fallthru
    _
  // Predicated region
  $region10: #{tpu_custom_call.1} parent=0 // pred_check
    _
  $region11: #{tpu_custom_call.1} parent=0 // pred_check_branch
    %13 = sbr.rel (0) target = $region13
  $region12: #{tpu_custom_call.1} parent=0 // pred_region
    _
  $region13: #{tpu_custom_call.1} parent=0 // pred_fallthru
    _
  %v14 = vld [vmem:[%s0] sm:$0xff]
  %v15 = vld [vmem:[%s0 + $0x8] sm:$0xff]
  %v16 = vld [vmem:[%s0 + $0x10] sm:$0xff]
  %v17 = vld [vmem:[%s0 + $0x18] sm:$0xff]
  %v18 = vld [vmem:[%s0 + $0x20] sm:$0xff]
  %v19 = vld [vmem:[%s0 + $0x28] sm:$0xff]
  %v20 = vld [vmem:[%s0 + $0x30] sm:$0xff]
  %v21 = vld [vmem:[%s0 + $0x38] sm:$0xff]
  %v22 = vld [vmem:[%s0 + $0x40] sm:$0xff]
  %v23 = vld [vmem:[%s0 + $0x48] sm:$0xff]
  %v24 = vld [vmem:[%s0 + $0x50] sm:$0xff]
  %v25 = vld [vmem:[%s0 + $0x58] sm:$0xff]
  %v26 = vld [vmem:[%s0 + $0x60] sm:$0xff]
  %v27 = vld [vmem:[%s0 + $0x68] sm:$0xff]
  %v28 = vld [vmem:[%s0 + $0x70] sm:$0xff]
  %v29 = vld [vmem:[%s0 + $0x78] sm:$0xff]
  %v30 = vld [vmem:[%s0 + $0x80] sm:$0xff]
  %v31 = vld [vmem:[%s0 + $0x88] sm:$0xff]
  %v32 = vld [vmem:[%s0 + $0x90] sm:$0xff]
  %v33 = vld [vmem:[%s0 + $0x98] sm:$0xff]
  %v34 = vld [vmem:[%s0 + $0xa0] sm:$0xff]
  %v35 = vld [vmem:[%s0 + $0xa8] sm:$0xff]
  %v36 = vld [vmem:[%s0 + $0xb0] sm:$0xff]
  %v37 = vld [vmem:[%s0 + $0xb8] sm:$0xff]
  %v38 = vld [vmem:[%s0 + $0xc0] sm:$0xff]
  %v39 = vld [vmem:[%s0 + $0xc8] sm:$0xff]
  %v40 = vld [vmem:[%s0 + $0xd0] sm:$0xff]
  %v41 = vld [vmem:[%s0 + $0xd8] sm:$0xff]
  %v42 = vld [vmem:[%s0 + $0xe0] sm:$0xff]
  %v43 = vld [vmem:[%s0 + $0xe8] sm:$0xff]
  %v44 = vld [vmem:[%s0 + $0xf0] sm:$0xff]
  %v45 = vld [vmem:[%s0 + $0xf8] sm:$0xff]
  %v46 = vld [vmem:[%s0 + $0x100] sm:$0xff]
  %v47 = vld [vmem:[%s0 + $0x108] sm:$0xff]
  %v48 = vld [vmem:[%s0 + $0x110] sm:$0xff]
  %v49 = vld [vmem:[%s0 + $0x118] sm:$0xff]
  %v50 = vld [vmem:[%s0 + $0x120] sm:$0xff]
  %v51 = vld [vmem:[%s0 + $0x128] sm:$0xff]
  %v52 = vld [vmem:[%s0 + $0x130] sm:$0xff]
  %v53 = vld [vmem:[%s0 + $0x138] sm:$0xff]
  %v54 = vld [vmem:[%s0 + $0x140] sm:$0xff]
  %v55 = vld [vmem:[%s0 + $0x148] sm:$0xff]
  %v56 = vld [vmem:[%s0 + $0x150] sm:$0xff]
  %v57 = vld [vmem:[%s0 + $0x158] sm:$0xff]
  %v58 = vld [vmem:[%s0 + $0x160] sm:$0xff]
  %v59 = vld [vmem:[%s0 + $0x168] sm:$0xff]
  %v60 = vld [vmem:[%s0 + $0x170] sm:$0xff]
  %v61 = vld [vmem:[%s0 + $0x178] sm:$0xff]
  %v62 = vld [vmem:[%s0 + $0x180] sm:$0xff]
  %v63 = vld [vmem:[%s0 + $0x188] sm:$0xff]
  %v64 = vld [vmem:[%s0 + $0x190] sm:$0xff]
  %v65 = vld [vmem:[%s0 + $0x198] sm:$0xff]
  %v66 = vld [vmem:[%s0 + $0x1a0] sm:$0xff]
  %v67 = vld [vmem:[%s0 + $0x1a8] sm:$0xff]
  %v68 = vld [vmem:[%s0 + $0x1b0] sm:$0xff]
  %v69 = vld [vmem:[%s0 + $0x1b8] sm:$0xff]
  %v70 = vld [vmem:[%s0 + $0x1c0] sm:$0xff]
  %v71 = vld [vmem:[%s0 + $0x1c8] sm:$0xff]
  %v72 = vld [vmem:[%s0 + $0x1d0] sm:$0xff]
  %v73 = vld [vmem:[%s0 + $0x1d8] sm:$0xff]
  %v74 = vld [vmem:[%s0 + $0x1e0] sm:$0xff]
  %v75 = vld [vmem:[%s0 + $0x1e8] sm:$0xff]
  %v76 = vld [vmem:[%s0 + $0x1f0] sm:$0xff]
  %v77 = vld [vmem:[%s0 + $0x1f8] sm:$0xff]
  %v78 = vld [vmem:[%s1] sm:$0xff]
  %v79 = vld [vmem:[%s1 + $0x8] sm:$0x1f]
  %v80 = vld [vmem:[%s2] sm:$0x1]
  %v82 = vlaneseq
  %v83 = vshrl.u32 %v82, 7
  %v84 = vsub.s32 0, %v83
  %v85 = vrot.slane %v80, %v84
  %vm87 = vcmask 105472
  %v89 = vsel %vm87, %v14, 0
  %v92 = vsel %vm87, %v15, 0
  %v95 = vsel %vm87, %v16, 0
  %v98 = vsel %vm87, %v17, 0
  %v101 = vsel %vm87, %v18, 0
  %v104 = vsel %vm87, %v19, 0
  %v107 = vsel %vm87, %v20, 0
  %v110 = vsel %vm87, %v21, 0
  %v113 = vsel %vm87, %v22, 0
  %v116 = vsel %vm87, %v23, 0
  %v119 = vsel %vm87, %v24, 0
  %v122 = vsel %vm87, %v25, 0
  %v125 = vsel %vm87, %v26, 0
  %v128 = vsel %vm87, %v27, 0
  %v131 = vsel %vm87, %v28, 0
  %v134 = vsel %vm87, %v29, 0
  %v137 = vsel %vm87, %v30, 0
  %v140 = vsel %vm87, %v31, 0
  %v143 = vsel %vm87, %v32, 0
  %v146 = vsel %vm87, %v33, 0
  %v149 = vsel %vm87, %v34, 0
  %v152 = vsel %vm87, %v35, 0
  %v155 = vsel %vm87, %v36, 0
  %v158 = vsel %vm87, %v37, 0
  %v161 = vsel %vm87, %v38, 0
  %v164 = vsel %vm87, %v39, 0
  %v167 = vsel %vm87, %v40, 0
  %v170 = vsel %vm87, %v41, 0
  %v173 = vsel %vm87, %v42, 0
  %v176 = vsel %vm87, %v43, 0
  %v179 = vsel %vm87, %v44, 0
  %v182 = vsel %vm87, %v45, 0
  %v185 = vsel %vm87, %v46, 0
  %v188 = vsel %vm87, %v47, 0
  %v191 = vsel %vm87, %v48, 0
  %v194 = vsel %vm87, %v49, 0
  %v197 = vsel %vm87, %v50, 0
  %v200 = vsel %vm87, %v51, 0
  %v203 = vsel %vm87, %v52, 0
  %v206 = vsel %vm87, %v53, 0
  %v209 = vsel %vm87, %v54, 0
  %v212 = vsel %vm87, %v55, 0
  %v215 = vsel %vm87, %v56, 0
  %v218 = vsel %vm87, %v57, 0
  %v221 = vsel %vm87, %v58, 0
  %v224 = vsel %vm87, %v59, 0
  %v227 = vsel %vm87, %v60, 0
  %v230 = vsel %vm87, %v61, 0
  %v233 = vsel %vm87, %v62, 0
  %v236 = vsel %vm87, %v63, 0
  %v239 = vsel %vm87, %v64, 0
  %v242 = vsel %vm87, %v65, 0
  %v245 = vsel %vm87, %v66, 0
  %v248 = vsel %vm87, %v67, 0
  %v251 = vsel %vm87, %v68, 0
  %v254 = vsel %vm87, %v69, 0
  %v257 = vsel %vm87, %v70, 0
  %v260 = vsel %vm87, %v71, 0
  %v263 = vsel %vm87, %v72, 0
  %v266 = vsel %vm87, %v73, 0
  %v269 = vsel %vm87, %v74, 0
  %v272 = vsel %vm87, %v75, 0
  %v275 = vsel %vm87, %v76, 0
  %v278 = vsel %vm87, %v77, 0
  %vm280 = vcmask 1044480
  %v282 = vsel %vm280, %v79, 0
  %284 = vmatprep.subr.mxu0 0.0
  %285 = vmatpush1.msra.mxu0 0.0
  %286 = vmatprep.subr.mxu0 0.0
  %287 = vmatpush1.msra.mxu0 0.0
  %288 = vmatprep.subr.mxu0 0.0
  %289 = vmatpush1.msra.mxu0 0.0
  %290 = vmatprep.subr.mxu0 0.0
  %291 = vmatpush1.msra.mxu0 0.0
  %292 = vmatprep.subr.mxu0 0.0
  %293 = vmatpush1.msra.mxu0 0.0
  %294 = vmatprep.subr.mxu0 0.0
  %295 = vmatpush1.msra.mxu0 0.0
  %296 = vmatprep.subr.mxu0 0.0
  %297 = vmatpush1.msra.mxu0 0.0
  %298 = vmatprep.subr.mxu0 0.0
  %299 = vmatpush1.msra.mxu0 0.0
  %300 = vmatprep.subr.mxu0 0.0
  %301 = vmatpush1.msra.mxu0 0.0
  %302 = vmatprep.subr.mxu0 0.0
  %303 = vmatpush1.msra.mxu0 0.0
  %304 = vmatprep.subr.mxu0 0.0
  %305 = vmatpush1.msra.mxu0 0.0
  %306 = vmatprep.subr.mxu0 0.0
  %307 = vmatpush1.msra.mxu0 0.0
  %308 = vmatprep.subr.mxu0 0.0
  %309 = vmatpush1.msra.mxu0 0.0
  %310 = vmatprep.subr.mxu0 0.0
  %311 = vmatpush1.msra.mxu0 0.0
  %312 = vmatprep.subr.mxu0 0.0
  %313 = vmatpush1.msra.mxu0 %v282
  %314 = vmatprep.subr.mxu0 0.0
  %315 = vmatpush1.msra.mxu0 %v78
  %316 = vmatprep.subr.mxu0 0.0
  %317 = vmatpush2.msra.mxu0 0.0
  %318 = vmatprep.subr.mxu0 0.0
  %319 = vmatpush2.msra.mxu0 0.0
  %320 = vmatprep.subr.mxu0 0.0
  %321 = vmatpush2.msra.mxu0 0.0
  %322 = vmatprep.subr.mxu0 0.0
  %323 = vmatpush2.msra.mxu0 0.0
  %324 = vmatprep.subr.mxu0 0.0
  %325 = vmatpush2.msra.mxu0 0.0
  %326 = vmatprep.subr.mxu0 0.0
  %327 = vmatpush2.msra.mxu0 0.0
  %328 = vmatprep.subr.mxu0 0.0
  %329 = vmatpush2.msra.mxu0 0.0
  %330 = vmatprep.subr.mxu0 0.0
  %331 = vmatpush2.msra.mxu0 0.0
  %332 = vmatprep.subr.mxu0 0.0
  %333 = vmatpush2.msra.mxu0 0.0
  %334 = vmatprep.subr.mxu0 0.0
  %335 = vmatpush2.msra.mxu0 0.0
  %336 = vmatprep.subr.mxu0 0.0
  %337 = vmatpush2.msra.mxu0 0.0
  %338 = vmatprep.subr.mxu0 0.0
  %339 = vmatpush2.msra.mxu0 0.0
  %340 = vmatprep.subr.mxu0 0.0
  %341 = vmatpush2.msra.mxu0 0.0
  %342 = vmatprep.subr.mxu0 0.0
  %343 = vmatpush2.msra.mxu0 0.0
  %344 = vmatprep.subr.mxu0 0.0
  %345 = vmatpush2.msra.mxu0 0.0
  %346 = vmatprep.subr.mxu0 0.0
  %347 = vmatpush2.msra.mxu0 0.0
  %348 = vmatprep.mubr.f32.mxu0 0.0
  %349 = vmatmul.mubr.f32.gmra.mxu0 %v89
  %v350 = vpop.f32.mrf.mxu0
  %v351 = vadd.f32 %v85, %v350
  %v352 = vpop.f32.mrf.mxu0
  %353 = vmatprep.mubr.f32.mxu0 0.0
  %354 = vmatmul.mubr.f32.gmra.mxu0 %v92
  %v355 = vpop.f32.mrf.mxu0
  %v356 = vadd.f32 %v85, %v355
  %v357 = vpop.f32.mrf.mxu0
  %358 = vmatprep.mubr.f32.mxu0 0.0
  %359 = vmatmul.mubr.f32.gmra.mxu0 %v95
  %v360 = vpop.f32.mrf.mxu0
  %v361 = vadd.f32 %v85, %v360
  %v362 = vpop.f32.mrf.mxu0
  %363 = vmatprep.mubr.f32.mxu0 0.0
  %364 = vmatmul.mubr.f32.gmra.mxu0 %v98
  %v365 = vpop.f32.mrf.mxu0
  %v366 = vadd.f32 %v85, %v365
  %v367 = vpop.f32.mrf.mxu0
  %368 = vmatprep.mubr.f32.mxu0 0.0
  %369 = vmatmul.mubr.f32.gmra.mxu0 %v101
  %v370 = vpop.f32.mrf.mxu0
  %v371 = vadd.f32 %v85, %v370
  %v372 = vpop.f32.mrf.mxu0
  %373 = vmatprep.mubr.f32.mxu0 0.0
  %374 = vmatmul.mubr.f32.gmra.mxu0 %v104
  %v375 = vpop.f32.mrf.mxu0
  %v376 = vadd.f32 %v85, %v375
  %v377 = vpop.f32.mrf.mxu0
  %378 = vmatprep.mubr.f32.mxu0 0.0
  %379 = vmatmul.mubr.f32.gmra.mxu0 %v107
  %v380 = vpop.f32.mrf.mxu0
  %v381 = vadd.f32 %v85, %v380
  %v382 = vpop.f32.mrf.mxu0
  %383 = vmatprep.mubr.f32.mxu0 0.0
  %384 = vmatmul.mubr.f32.gmra.mxu0 %v110
  %v385 = vpop.f32.mrf.mxu0
  %v386 = vadd.f32 %v85, %v385
  %v387 = vpop.f32.mrf.mxu0
  %388 = vmatprep.mubr.f32.mxu0 0.0
  %389 = vmatmul.mubr.f32.gmra.mxu0 %v113
  %v390 = vpop.f32.mrf.mxu0
  %v391 = vadd.f32 %v85, %v390
  %v392 = vpop.f32.mrf.mxu0
  %393 = vmatprep.mubr.f32.mxu0 0.0
  %394 = vmatmul.mubr.f32.gmra.mxu0 %v116
  %v395 = vpop.f32.mrf.mxu0
  %v396 = vadd.f32 %v85, %v395
  %v397 = vpop.f32.mrf.mxu0
  %398 = vmatprep.mubr.f32.mxu0 0.0
  %399 = vmatmul.mubr.f32.gmra.mxu0 %v119
  %v400 = vpop.f32.mrf.mxu0
  %v401 = vadd.f32 %v85, %v400
  %v402 = vpop.f32.mrf.mxu0
  %403 = vmatprep.mubr.f32.mxu0 0.0
  %404 = vmatmul.mubr.f32.gmra.mxu0 %v122
  %v405 = vpop.f32.mrf.mxu0
  %v406 = vadd.f32 %v85, %v405
  %v407 = vpop.f32.mrf.mxu0
  %408 = vmatprep.mubr.f32.mxu0 0.0
  %409 = vmatmul.mubr.f32.gmra.mxu0 %v125
  %v410 = vpop.f32.mrf.mxu0
  %v411 = vadd.f32 %v85, %v410
  %v412 = vpop.f32.mrf.mxu0
  %413 = vmatprep.mubr.f32.mxu0 0.0
  %414 = vmatmul.mubr.f32.gmra.mxu0 %v128
  %v415 = vpop.f32.mrf.mxu0
  %v416 = vadd.f32 %v85, %v415
  %v417 = vpop.f32.mrf.mxu0
  %418 = vmatprep.mubr.f32.mxu0 0.0
  %419 = vmatmul.mubr.f32.gmra.mxu0 %v131
  %v420 = vpop.f32.mrf.mxu0
  %v421 = vadd.f32 %v85, %v420
  %v422 = vpop.f32.mrf.mxu0
  %423 = vmatprep.mubr.f32.mxu0 0.0
  %424 = vmatmul.mubr.f32.gmra.mxu0 %v134
  %v425 = vpop.f32.mrf.mxu0
  %v426 = vadd.f32 %v85, %v425
  %v427 = vpop.f32.mrf.mxu0
  %428 = vmatprep.mubr.f32.mxu0 0.0
  %429 = vmatmul.mubr.f32.gmra.mxu0 %v137
  %v430 = vpop.f32.mrf.mxu0
  %v431 = vadd.f32 %v85, %v430
  %v432 = vpop.f32.mrf.mxu0
  %433 = vmatprep.mubr.f32.mxu0 0.0
  %434 = vmatmul.mubr.f32.gmra.mxu0 %v140
  %v435 = vpop.f32.mrf.mxu0
  %v436 = vadd.f32 %v85, %v435
  %v437 = vpop.f32.mrf.mxu0
  %438 = vmatprep.mubr.f32.mxu0 0.0
  %439 = vmatmul.mubr.f32.gmra.mxu0 %v143
  %v440 = vpop.f32.mrf.mxu0
  %v441 = vadd.f32 %v85, %v440
  %v442 = vpop.f32.mrf.mxu0
  %443 = vmatprep.mubr.f32.mxu0 0.0
  %444 = vmatmul.mubr.f32.gmra.mxu0 %v146
  %v445 = vpop.f32.mrf.mxu0
  %v446 = vadd.f32 %v85, %v445
  %v447 = vpop.f32.mrf.mxu0
  %448 = vmatprep.mubr.f32.mxu0 0.0
  %449 = vmatmul.mubr.f32.gmra.mxu0 %v149
  %v450 = vpop.f32.mrf.mxu0
  %v451 = vadd.f32 %v85, %v450
  %v452 = vpop.f32.mrf.mxu0
  %453 = vmatprep.mubr.f32.mxu0 0.0
  %454 = vmatmul.mubr.f32.gmra.mxu0 %v152
  %v455 = vpop.f32.mrf.mxu0
  %v456 = vadd.f32 %v85, %v455
  %v457 = vpop.f32.mrf.mxu0
  %458 = vmatprep.mubr.f32.mxu0 0.0
  %459 = vmatmul.mubr.f32.gmra.mxu0 %v155
  %v460 = vpop.f32.mrf.mxu0
  %v461 = vadd.f32 %v85, %v460
  %v462 = vpop.f32.mrf.mxu0
  %463 = vmatprep.mubr.f32.mxu0 0.0
  %464 = vmatmul.mubr.f32.gmra.mxu0 %v158
  %v465 = vpop.f32.mrf.mxu0
  %v466 = vadd.f32 %v85, %v465
  %v467 = vpop.f32.mrf.mxu0
  %468 = vmatprep.mubr.f32.mxu0 0.0
  %469 = vmatmul.mubr.f32.gmra.mxu0 %v161
  %v470 = vpop.f32.mrf.mxu0
  %v471 = vadd.f32 %v85, %v470
  %v472 = vpop.f32.mrf.mxu0
  %473 = vmatprep.mubr.f32.mxu0 0.0
  %474 = vmatmul.mubr.f32.gmra.mxu0 %v164
  %v475 = vpop.f32.mrf.mxu0
  %v476 = vadd.f32 %v85, %v475
  %v477 = vpop.f32.mrf.mxu0
  %478 = vmatprep.mubr.f32.mxu0 0.0
  %479 = vmatmul.mubr.f32.gmra.mxu0 %v167
  %v480 = vpop.f32.mrf.mxu0
  %v481 = vadd.f32 %v85, %v480
  %v482 = vpop.f32.mrf.mxu0
  %483 = vmatprep.mubr.f32.mxu0 0.0
  %484 = vmatmul.mubr.f32.gmra.mxu0 %v170
  %v485 = vpop.f32.mrf.mxu0
  %v486 = vadd.f32 %v85, %v485
  %v487 = vpop.f32.mrf.mxu0
  %488 = vmatprep.mubr.f32.mxu0 0.0
  %489 = vmatmul.mubr.f32.gmra.mxu0 %v173
  %v490 = vpop.f32.mrf.mxu0
  %v491 = vadd.f32 %v85, %v490
  %v492 = vpop.f32.mrf.mxu0
  %493 = vmatprep.mubr.f32.mxu0 0.0
  %494 = vmatmul.mubr.f32.gmra.mxu0 %v176
  %v495 = vpop.f32.mrf.mxu0
  %v496 = vadd.f32 %v85, %v495
  %v497 = vpop.f32.mrf.mxu0
  %498 = vmatprep.mubr.f32.mxu0 0.0
  %499 = vmatmul.mubr.f32.gmra.mxu0 %v179
  %v500 = vpop.f32.mrf.mxu0
  %v501 = vadd.f32 %v85, %v500
  %v502 = vpop.f32.mrf.mxu0
  %503 = vmatprep.mubr.f32.mxu0 0.0
  %504 = vmatmul.mubr.f32.gmra.mxu0 %v182
  %v505 = vpop.f32.mrf.mxu0
  %v506 = vadd.f32 %v85, %v505
  %v507 = vpop.f32.mrf.mxu0
  %508 = vmatprep.mubr.f32.mxu0 0.0
  %509 = vmatmul.mubr.f32.gmra.mxu0 %v185
  %v510 = vpop.f32.mrf.mxu0
  %v511 = vadd.f32 %v85, %v510
  %v512 = vpop.f32.mrf.mxu0
  %513 = vmatprep.mubr.f32.mxu0 0.0
  %514 = vmatmul.mubr.f32.gmra.mxu0 %v188
  %v515 = vpop.f32.mrf.mxu0
  %v516 = vadd.f32 %v85, %v515
  %v517 = vpop.f32.mrf.mxu0
  %518 = vmatprep.mubr.f32.mxu0 0.0
  %519 = vmatmul.mubr.f32.gmra.mxu0 %v191
  %v520 = vpop.f32.mrf.mxu0
  %v521 = vadd.f32 %v85, %v520
  %v522 = vpop.f32.mrf.mxu0
  %523 = vmatprep.mubr.f32.mxu0 0.0
  %524 = vmatmul.mubr.f32.gmra.mxu0 %v194
  %v525 = vpop.f32.mrf.mxu0
  %v526 = vadd.f32 %v85, %v525
  %v527 = vpop.f32.mrf.mxu0
  %528 = vmatprep.mubr.f32.mxu0 0.0
  %529 = vmatmul.mubr.f32.gmra.mxu0 %v197
  %v530 = vpop.f32.mrf.mxu0
  %v531 = vadd.f32 %v85, %v530
  %v532 = vpop.f32.mrf.mxu0
  %533 = vmatprep.mubr.f32.mxu0 0.0
  %534 = vmatmul.mubr.f32.gmra.mxu0 %v200
  %v535 = vpop.f32.mrf.mxu0
  %v536 = vadd.f32 %v85, %v535
  %v537 = vpop.f32.mrf.mxu0
  %538 = vmatprep.mubr.f32.mxu0 0.0
  %539 = vmatmul.mubr.f32.gmra.mxu0 %v203
  %v540 = vpop.f32.mrf.mxu0
  %v541 = vadd.f32 %v85, %v540
  %v542 = vpop.f32.mrf.mxu0
  %543 = vmatprep.mubr.f32.mxu0 0.0
  %544 = vmatmul.mubr.f32.gmra.mxu0 %v206
  %v545 = vpop.f32.mrf.mxu0
  %v546 = vadd.f32 %v85, %v545
  %v547 = vpop.f32.mrf.mxu0
  %548 = vmatprep.mubr.f32.mxu0 0.0
  %549 = vmatmul.mubr.f32.gmra.mxu0 %v209
  %v550 = vpop.f32.mrf.mxu0
  %v551 = vadd.f32 %v85, %v550
  %v552 = vpop.f32.mrf.mxu0
  %553 = vmatprep.mubr.f32.mxu0 0.0
  %554 = vmatmul.mubr.f32.gmra.mxu0 %v212
  %v555 = vpop.f32.mrf.mxu0
  %v556 = vadd.f32 %v85, %v555
  %v557 = vpop.f32.mrf.mxu0
  %558 = vmatprep.mubr.f32.mxu0 0.0
  %559 = vmatmul.mubr.f32.gmra.mxu0 %v215
  %v560 = vpop.f32.mrf.mxu0
  %v561 = vadd.f32 %v85, %v560
  %v562 = vpop.f32.mrf.mxu0
  %563 = vmatprep.mubr.f32.mxu0 0.0
  %564 = vmatmul.mubr.f32.gmra.mxu0 %v218
  %v565 = vpop.f32.mrf.mxu0
  %v566 = vadd.f32 %v85, %v565
  %v567 = vpop.f32.mrf.mxu0
  %568 = vmatprep.mubr.f32.mxu0 0.0
  %569 = vmatmul.mubr.f32.gmra.mxu0 %v221
  %v570 = vpop.f32.mrf.mxu0
  %v571 = vadd.f32 %v85, %v570
  %v572 = vpop.f32.mrf.mxu0
  %573 = vmatprep.mubr.f32.mxu0 0.0
  %574 = vmatmul.mubr.f32.gmra.mxu0 %v224
  %v575 = vpop.f32.mrf.mxu0
  %v576 = vadd.f32 %v85, %v575
  %v577 = vpop.f32.mrf.mxu0
  %578 = vmatprep.mubr.f32.mxu0 0.0
  %579 = vmatmul.mubr.f32.gmra.mxu0 %v227
  %v580 = vpop.f32.mrf.mxu0
  %v581 = vadd.f32 %v85, %v580
  %v582 = vpop.f32.mrf.mxu0
  %583 = vmatprep.mubr.f32.mxu0 0.0
  %584 = vmatmul.mubr.f32.gmra.mxu0 %v230
  %v585 = vpop.f32.mrf.mxu0
  %v586 = vadd.f32 %v85, %v585
  %v587 = vpop.f32.mrf.mxu0
  %588 = vmatprep.mubr.f32.mxu0 0.0
  %589 = vmatmul.mubr.f32.gmra.mxu0 %v233
  %v590 = vpop.f32.mrf.mxu0
  %v591 = vadd.f32 %v85, %v590
  %v592 = vpop.f32.mrf.mxu0
  %593 = vmatprep.mubr.f32.mxu0 0.0
  %594 = vmatmul.mubr.f32.gmra.mxu0 %v236
  %v595 = vpop.f32.mrf.mxu0
  %v596 = vadd.f32 %v85, %v595
  %v597 = vpop.f32.mrf.mxu0
  %598 = vmatprep.mubr.f32.mxu0 0.0
  %599 = vmatmul.mubr.f32.gmra.mxu0 %v239
  %v600 = vpop.f32.mrf.mxu0
  %v601 = vadd.f32 %v85, %v600
  %v602 = vpop.f32.mrf.mxu0
  %603 = vmatprep.mubr.f32.mxu0 0.0
  %604 = vmatmul.mubr.f32.gmra.mxu0 %v242
  %v605 = vpop.f32.mrf.mxu0
  %v606 = vadd.f32 %v85, %v605
  %v607 = vpop.f32.mrf.mxu0
  %608 = vmatprep.mubr.f32.mxu0 0.0
  %609 = vmatmul.mubr.f32.gmra.mxu0 %v245
  %v610 = vpop.f32.mrf.mxu0
  %v611 = vadd.f32 %v85, %v610
  %v612 = vpop.f32.mrf.mxu0
  %613 = vmatprep.mubr.f32.mxu0 0.0
  %614 = vmatmul.mubr.f32.gmra.mxu0 %v248
  %v615 = vpop.f32.mrf.mxu0
  %v616 = vadd.f32 %v85, %v615
  %v617 = vpop.f32.mrf.mxu0
  %618 = vmatprep.mubr.f32.mxu0 0.0
  %619 = vmatmul.mubr.f32.gmra.mxu0 %v251
  %v620 = vpop.f32.mrf.mxu0
  %v621 = vadd.f32 %v85, %v620
  %v622 = vpop.f32.mrf.mxu0
  %623 = vmatprep.mubr.f32.mxu0 0.0
  %624 = vmatmul.mubr.f32.gmra.mxu0 %v254
  %v625 = vpop.f32.mrf.mxu0
  %v626 = vadd.f32 %v85, %v625
  %v627 = vpop.f32.mrf.mxu0
  %628 = vmatprep.mubr.f32.mxu0 0.0
  %629 = vmatmul.mubr.f32.gmra.mxu0 %v257
  %v630 = vpop.f32.mrf.mxu0
  %v631 = vadd.f32 %v85, %v630
  %v632 = vpop.f32.mrf.mxu0
  %633 = vmatprep.mubr.f32.mxu0 0.0
  %634 = vmatmul.mubr.f32.gmra.mxu0 %v260
  %v635 = vpop.f32.mrf.mxu0
  %v636 = vadd.f32 %v85, %v635
  %v637 = vpop.f32.mrf.mxu0
  %638 = vmatprep.mubr.f32.mxu0 0.0
  %639 = vmatmul.mubr.f32.gmra.mxu0 %v263
  %v640 = vpop.f32.mrf.mxu0
  %v641 = vadd.f32 %v85, %v640
  %v642 = vpop.f32.mrf.mxu0
  %643 = vmatprep.mubr.f32.mxu0 0.0
  %644 = vmatmul.mubr.f32.gmra.mxu0 %v266
  %v645 = vpop.f32.mrf.mxu0
  %v646 = vadd.f32 %v85, %v645
  %v647 = vpop.f32.mrf.mxu0
  %648 = vmatprep.mubr.f32.mxu0 0.0
  %649 = vmatmul.mubr.f32.gmra.mxu0 %v269
  %v650 = vpop.f32.mrf.mxu0
  %v651 = vadd.f32 %v85, %v650
  %v652 = vpop.f32.mrf.mxu0
  %653 = vmatprep.mubr.f32.mxu0 0.0
  %654 = vmatmul.mubr.f32.gmra.mxu0 %v272
  %v655 = vpop.f32.mrf.mxu0
  %v656 = vadd.f32 %v85, %v655
  %v657 = vpop.f32.mrf.mxu0
  %658 = vmatprep.mubr.f32.mxu0 0.0
  %659 = vmatmul.mubr.f32.gmra.mxu0 %v275
  %v660 = vpop.f32.mrf.mxu0
  %v661 = vadd.f32 %v85, %v660
  %v662 = vpop.f32.mrf.mxu0
  %663 = vmatprep.mubr.f32.mxu0 0.0
  %664 = vmatmul.mubr.f32.gmra.mxu0 %v278
  %v665 = vpop.f32.mrf.mxu0
  %v666 = vadd.f32 %v85, %v665
  %v667 = vpop.f32.mrf.mxu0
  %668 = vdwg.mxu0
  %vm669 = vcmp.ge.f32.partialorder %v351, 0.0
  %vm670 = vcmp.ge.f32.partialorder %v356, 0.0
  %vm671 = vcmp.ge.f32.partialorder %v361, 0.0
  %vm672 = vcmp.ge.f32.partialorder %v366, 0.0
  %vm673 = vcmp.ge.f32.partialorder %v371, 0.0
  %vm674 = vcmp.ge.f32.partialorder %v376, 0.0
  %vm675 = vcmp.ge.f32.partialorder %v381, 0.0
  %vm676 = vcmp.ge.f32.partialorder %v386, 0.0
  %vm677 = vcmp.ge.f32.partialorder %v391, 0.0
  %vm678 = vcmp.ge.f32.partialorder %v396, 0.0
  %vm679 = vcmp.ge.f32.partialorder %v401, 0.0
  %vm680 = vcmp.ge.f32.partialorder %v406, 0.0
  %vm681 = vcmp.ge.f32.partialorder %v411, 0.0
  %vm682 = vcmp.ge.f32.partialorder %v416, 0.0
  %vm683 = vcmp.ge.f32.partialorder %v421, 0.0
  %vm684 = vcmp.ge.f32.partialorder %v426, 0.0
  %vm685 = vcmp.ge.f32.partialorder %v431, 0.0
  %vm686 = vcmp.ge.f32.partialorder %v436, 0.0
  %vm687 = vcmp.ge.f32.partialorder %v441, 0.0
  %vm688 = vcmp.ge.f32.partialorder %v446, 0.0
  %vm689 = vcmp.ge.f32.partialorder %v451, 0.0
  %vm690 = vcmp.ge.f32.partialorder %v456, 0.0
  %vm691 = vcmp.ge.f32.partialorder %v461, 0.0
  %vm692 = vcmp.ge.f32.partialorder %v466, 0.0
  %vm693 = vcmp.ge.f32.partialorder %v471, 0.0
  %vm694 = vcmp.ge.f32.partialorder %v476, 0.0
  %vm695 = vcmp.ge.f32.partialorder %v481, 0.0
  %vm696 = vcmp.ge.f32.partialorder %v486, 0.0
  %vm697 = vcmp.ge.f32.partialorder %v491, 0.0
  %vm698 = vcmp.ge.f32.partialorder %v496, 0.0
  %vm699 = vcmp.ge.f32.partialorder %v501, 0.0
  %vm700 = vcmp.ge.f32.partialorder %v506, 0.0
  %vm701 = vcmp.ge.f32.partialorder %v511, 0.0
  %vm702 = vcmp.ge.f32.partialorder %v516, 0.0
  %vm703 = vcmp.ge.f32.partialorder %v521, 0.0
  %vm704 = vcmp.ge.f32.partialorder %v526, 0.0
  %vm705 = vcmp.ge.f32.partialorder %v531, 0.0
  %vm706 = vcmp.ge.f32.partialorder %v536, 0.0
  %vm707 = vcmp.ge.f32.partialorder %v541, 0.0
  %vm708 = vcmp.ge.f32.partialorder %v546, 0.0
  %vm709 = vcmp.ge.f32.partialorder %v551, 0.0
  %vm710 = vcmp.ge.f32.partialorder %v556, 0.0
  %vm711 = vcmp.ge.f32.partialorder %v561, 0.0
  %vm712 = vcmp.ge.f32.partialorder %v566, 0.0
  %vm713 = vcmp.ge.f32.partialorder %v571, 0.0
  %vm714 = vcmp.ge.f32.partialorder %v576, 0.0
  %vm715 = vcmp.ge.f32.partialorder %v581, 0.0
  %vm716 = vcmp.ge.f32.partialorder %v586, 0.0
  %vm717 = vcmp.ge.f32.partialorder %v591, 0.0
  %vm718 = vcmp.ge.f32.partialorder %v596, 0.0
  %vm719 = vcmp.ge.f32.partialorder %v601, 0.0
  %vm720 = vcmp.ge.f32.partialorder %v606, 0.0
  %vm721 = vcmp.ge.f32.partialorder %v611, 0.0
  %vm722 = vcmp.ge.f32.partialorder %v616, 0.0
  %vm723 = vcmp.ge.f32.partialorder %v621, 0.0
  %vm724 = vcmp.ge.f32.partialorder %v626, 0.0
  %vm725 = vcmp.ge.f32.partialorder %v631, 0.0
  %vm726 = vcmp.ge.f32.partialorder %v636, 0.0
  %vm727 = vcmp.ge.f32.partialorder %v641, 0.0
  %vm728 = vcmp.ge.f32.partialorder %v646, 0.0
  %vm729 = vcmp.ge.f32.partialorder %v651, 0.0
  %vm730 = vcmp.ge.f32.partialorder %v656, 0.0
  %vm731 = vcmp.ge.f32.partialorder %v661, 0.0
  %vm732 = vcmp.ge.f32.partialorder %v666, 0.0
  %v733 = vmul.f32 %v351, 0.2
  %v734 = vmul.f32 %v356, 0.2
  %v735 = vmul.f32 %v361, 0.2
  %v736 = vmul.f32 %v366, 0.2
  %v737 = vmul.f32 %v371, 0.2
  %v738 = vmul.f32 %v376, 0.2
  %v739 = vmul.f32 %v381, 0.2
  %v740 = vmul.f32 %v386, 0.2
  %v741 = vmul.f32 %v391, 0.2
  %v742 = vmul.f32 %v396, 0.2
  %v743 = vmul.f32 %v401, 0.2
  %v744 = vmul.f32 %v406, 0.2
  %v745 = vmul.f32 %v411, 0.2
  %v746 = vmul.f32 %v416, 0.2
  %v747 = vmul.f32 %v421, 0.2
  %v748 = vmul.f32 %v426, 0.2
  %v749 = vmul.f32 %v431, 0.2
  %v750 = vmul.f32 %v436, 0.2
  %v751 = vmul.f32 %v441, 0.2
  %v752 = vmul.f32 %v446, 0.2
  %v753 = vmul.f32 %v451, 0.2
  %v754 = vmul.f32 %v456, 0.2
  %v755 = vmul.f32 %v461, 0.2
  %v756 = vmul.f32 %v466, 0.2
  %v757 = vmul.f32 %v471, 0.2
  %v758 = vmul.f32 %v476, 0.2
  %v759 = vmul.f32 %v481, 0.2
  %v760 = vmul.f32 %v486, 0.2
  %v761 = vmul.f32 %v491, 0.2
  %v762 = vmul.f32 %v496, 0.2
  %v763 = vmul.f32 %v501, 0.2
  %v764 = vmul.f32 %v506, 0.2
  %v765 = vmul.f32 %v511, 0.2
  %v766 = vmul.f32 %v516, 0.2
  %v767 = vmul.f32 %v521, 0.2
  %v768 = vmul.f32 %v526, 0.2
  %v769 = vmul.f32 %v531, 0.2
  %v770 = vmul.f32 %v536, 0.2
  %v771 = vmul.f32 %v541, 0.2
  %v772 = vmul.f32 %v546, 0.2
  %v773 = vmul.f32 %v551, 0.2
  %v774 = vmul.f32 %v556, 0.2
  %v775 = vmul.f32 %v561, 0.2
  %v776 = vmul.f32 %v566, 0.2
  %v777 = vmul.f32 %v571, 0.2
  %v778 = vmul.f32 %v576, 0.2
  %v779 = vmul.f32 %v581, 0.2
  %v780 = vmul.f32 %v586, 0.2
  %v781 = vmul.f32 %v591, 0.2
  %v782 = vmul.f32 %v596, 0.2
  %v783 = vmul.f32 %v601, 0.2
  %v784 = vmul.f32 %v606, 0.2
  %v785 = vmul.f32 %v611, 0.2
  %v786 = vmul.f32 %v616, 0.2
  %v787 = vmul.f32 %v621, 0.2
  %v788 = vmul.f32 %v626, 0.2
  %v789 = vmul.f32 %v631, 0.2
  %v790 = vmul.f32 %v636, 0.2
  %v791 = vmul.f32 %v641, 0.2
  %v792 = vmul.f32 %v646, 0.2
  %v793 = vmul.f32 %v651, 0.2
  %v794 = vmul.f32 %v656, 0.2
  %v795 = vmul.f32 %v661, 0.2
  %v796 = vmul.f32 %v666, 0.2
  %v797 = vsel %vm669, %v351, %v733
  %v798 = vsel %vm670, %v356, %v734
  %v799 = vsel %vm671, %v361, %v735
  %v800 = vsel %vm672, %v366, %v736
  %v801 = vsel %vm673, %v371, %v737
  %v802 = vsel %vm674, %v376, %v738
  %v803 = vsel %vm675, %v381, %v739
  %v804 = vsel %vm676, %v386, %v740
  %v805 = vsel %vm677, %v391, %v741
  %v806 = vsel %vm678, %v396, %v742
  %v807 = vsel %vm679, %v401, %v743
  %v808 = vsel %vm680, %v406, %v744
  %v809 = vsel %vm681, %v411, %v745
  %v810 = vsel %vm682, %v416, %v746
  %v811 = vsel %vm683, %v421, %v747
  %v812 = vsel %vm684, %v426, %v748
  %v813 = vsel %vm685, %v431, %v749
  %v814 = vsel %vm686, %v436, %v750
  %v815 = vsel %vm687, %v441, %v751
  %v816 = vsel %vm688, %v446, %v752
  %v817 = vsel %vm689, %v451, %v753
  %v818 = vsel %vm690, %v456, %v754
  %v819 = vsel %vm691, %v461, %v755
  %v820 = vsel %vm692, %v466, %v756
  %v821 = vsel %vm693, %v471, %v757
  %v822 = vsel %vm694, %v476, %v758
  %v823 = vsel %vm695, %v481, %v759
  %v824 = vsel %vm696, %v486, %v760
  %v825 = vsel %vm697, %v491, %v761
  %v826 = vsel %vm698, %v496, %v762
  %v827 = vsel %vm699, %v501, %v763
  %v828 = vsel %vm700, %v506, %v764
  %v829 = vsel %vm701, %v511, %v765
  %v830 = vsel %vm702, %v516, %v766
  %v831 = vsel %vm703, %v521, %v767
  %v832 = vsel %vm704, %v526, %v768
  %v833 = vsel %vm705, %v531, %v769
  %v834 = vsel %vm706, %v536, %v770
  %v835 = vsel %vm707, %v541, %v771
  %v836 = vsel %vm708, %v546, %v772
  %v837 = vsel %vm709, %v551, %v773
  %v838 = vsel %vm710, %v556, %v774
  %v839 = vsel %vm711, %v561, %v775
  %v840 = vsel %vm712, %v566, %v776
  %v841 = vsel %vm713, %v571, %v777
  %v842 = vsel %vm714, %v576, %v778
  %v843 = vsel %vm715, %v581, %v779
  %v844 = vsel %vm716, %v586, %v780
  %v845 = vsel %vm717, %v591, %v781
  %v846 = vsel %vm718, %v596, %v782
  %v847 = vsel %vm719, %v601, %v783
  %v848 = vsel %vm720, %v606, %v784
  %v849 = vsel %vm721, %v611, %v785
  %v850 = vsel %vm722, %v616, %v786
  %v851 = vsel %vm723, %v621, %v787
  %v852 = vsel %vm724, %v626, %v788
  %v853 = vsel %vm725, %v631, %v789
  %v854 = vsel %vm726, %v636, %v790
  %v855 = vsel %vm727, %v641, %v791
  %v856 = vsel %vm728, %v646, %v792
  %v857 = vsel %vm729, %v651, %v793
  %v858 = vsel %vm730, %v656, %v794
  %v859 = vsel %vm731, %v661, %v795
  %v860 = vsel %vm732, %v666, %v796
  %vm861 = vcmask 261120
  %862 = vst.msk [vmem:[%s3] sm:$0xff] %vm861, %v797
  %863 = vst.msk [vmem:[%s3 + $0x8] sm:$0xff] %vm861, %v798
  %864 = vst.msk [vmem:[%s3 + $0x10] sm:$0xff] %vm861, %v799
  %865 = vst.msk [vmem:[%s3 + $0x18] sm:$0xff] %vm861, %v800
  %866 = vst.msk [vmem:[%s3 + $0x20] sm:$0xff] %vm861, %v801
  %867 = vst.msk [vmem:[%s3 + $0x28] sm:$0xff] %vm861, %v802
  %868 = vst.msk [vmem:[%s3 + $0x30] sm:$0xff] %vm861, %v803
  %869 = vst.msk [vmem:[%s3 + $0x38] sm:$0xff] %vm861, %v804
  %870 = vst.msk [vmem:[%s3 + $0x40] sm:$0xff] %vm861, %v805
  %871 = vst.msk [vmem:[%s3 + $0x48] sm:$0xff] %vm861, %v806
  %872 = vst.msk [vmem:[%s3 + $0x50] sm:$0xff] %vm861, %v807
  %873 = vst.msk [vmem:[%s3 + $0x58] sm:$0xff] %vm861, %v808
  %874 = vst.msk [vmem:[%s3 + $0x60] sm:$0xff] %vm861, %v809
  %875 = vst.msk [vmem:[%s3 + $0x68] sm:$0xff] %vm861, %v810
  %876 = vst.msk [vmem:[%s3 + $0x70] sm:$0xff] %vm861, %v811
  %877 = vst.msk [vmem:[%s3 + $0x78] sm:$0xff] %vm861, %v812
  %878 = vst.msk [vmem:[%s3 + $0x80] sm:$0xff] %vm861, %v813
  %879 = vst.msk [vmem:[%s3 + $0x88] sm:$0xff] %vm861, %v814
  %880 = vst.msk [vmem:[%s3 + $0x90] sm:$0xff] %vm861, %v815
  %881 = vst.msk [vmem:[%s3 + $0x98] sm:$0xff] %vm861, %v816
  %882 = vst.msk [vmem:[%s3 + $0xa0] sm:$0xff] %vm861, %v817
  %883 = vst.msk [vmem:[%s3 + $0xa8] sm:$0xff] %vm861, %v818
  %884 = vst.msk [vmem:[%s3 + $0xb0] sm:$0xff] %vm861, %v819
  %885 = vst.msk [vmem:[%s3 + $0xb8] sm:$0xff] %vm861, %v820
  %886 = vst.msk [vmem:[%s3 + $0xc0] sm:$0xff] %vm861, %v821
  %887 = vst.msk [vmem:[%s3 + $0xc8] sm:$0xff] %vm861, %v822
  %888 = vst.msk [vmem:[%s3 + $0xd0] sm:$0xff] %vm861, %v823
  %889 = vst.msk [vmem:[%s3 + $0xd8] sm:$0xff] %vm861, %v824
  %890 = vst.msk [vmem:[%s3 + $0xe0] sm:$0xff] %vm861, %v825
  %891 = vst.msk [vmem:[%s3 + $0xe8] sm:$0xff] %vm861, %v826
  %892 = vst.msk [vmem:[%s3 + $0xf0] sm:$0xff] %vm861, %v827
  %893 = vst.msk [vmem:[%s3 + $0xf8] sm:$0xff] %vm861, %v828
  %894 = vst.msk [vmem:[%s3 + $0x100] sm:$0xff] %vm861, %v829
  %895 = vst.msk [vmem:[%s3 + $0x108] sm:$0xff] %vm861, %v830
  %896 = vst.msk [vmem:[%s3 + $0x110] sm:$0xff] %vm861, %v831
  %897 = vst.msk [vmem:[%s3 + $0x118] sm:$0xff] %vm861, %v832
  %898 = vst.msk [vmem:[%s3 + $0x120] sm:$0xff] %vm861, %v833
  %899 = vst.msk [vmem:[%s3 + $0x128] sm:$0xff] %vm861, %v834
  %900 = vst.msk [vmem:[%s3 + $0x130] sm:$0xff] %vm861, %v835
  %901 = vst.msk [vmem:[%s3 + $0x138] sm:$0xff] %vm861, %v836
  %902 = vst.msk [vmem:[%s3 + $0x140] sm:$0xff] %vm861, %v837
  %903 = vst.msk [vmem:[%s3 + $0x148] sm:$0xff] %vm861, %v838
  %904 = vst.msk [vmem:[%s3 + $0x150] sm:$0xff] %vm861, %v839
  %905 = vst.msk [vmem:[%s3 + $0x158] sm:$0xff] %vm861, %v840
  %906 = vst.msk [vmem:[%s3 + $0x160] sm:$0xff] %vm861, %v841
  %907 = vst.msk [vmem:[%s3 + $0x168] sm:$0xff] %vm861, %v842
  %908 = vst.msk [vmem:[%s3 + $0x170] sm:$0xff] %vm861, %v843
  %909 = vst.msk [vmem:[%s3 + $0x178] sm:$0xff] %vm861, %v844
  %910 = vst.msk [vmem:[%s3 + $0x180] sm:$0xff] %vm861, %v845
  %911 = vst.msk [vmem:[%s3 + $0x188] sm:$0xff] %vm861, %v846
  %912 = vst.msk [vmem:[%s3 + $0x190] sm:$0xff] %vm861, %v847
  %913 = vst.msk [vmem:[%s3 + $0x198] sm:$0xff] %vm861, %v848
  %914 = vst.msk [vmem:[%s3 + $0x1a0] sm:$0xff] %vm861, %v849
  %915 = vst.msk [vmem:[%s3 + $0x1a8] sm:$0xff] %vm861, %v850
  %916 = vst.msk [vmem:[%s3 + $0x1b0] sm:$0xff] %vm861, %v851
  %917 = vst.msk [vmem:[%s3 + $0x1b8] sm:$0xff] %vm861, %v852
  %918 = vst.msk [vmem:[%s3 + $0x1c0] sm:$0xff] %vm861, %v853
  %919 = vst.msk [vmem:[%s3 + $0x1c8] sm:$0xff] %vm861, %v854
  %920 = vst.msk [vmem:[%s3 + $0x1d0] sm:$0xff] %vm861, %v855
  %921 = vst.msk [vmem:[%s3 + $0x1d8] sm:$0xff] %vm861, %v856
  %922 = vst.msk [vmem:[%s3 + $0x1e0] sm:$0xff] %vm861, %v857
  %923 = vst.msk [vmem:[%s3 + $0x1e8] sm:$0xff] %vm861, %v858
  %924 = vst.msk [vmem:[%s3 + $0x1f0] sm:$0xff] %vm861, %v859
  %925 = vst.msk [vmem:[%s3 + $0x1f8] sm:$0xff] %vm861, %v860
  // Predicated region
  $region14: #{tpu_custom_call.1} parent=0 // pred_check
    _
  $region15: #{tpu_custom_call.1} parent=0 // pred_check_branch
    %927 = sbr.rel (0) target = $region17
  $region16: #{tpu_custom_call.1} parent=0 // pred_region
    _
  $region17: #{tpu_custom_call.1} parent=0 // pred_fallthru
    _
  // Predicated region
  $region18: #{tpu_custom_call.1} parent=0 // pred_check
    _
  $region19: #{tpu_custom_call.1} parent=0 // pred_check_branch
    %929 = sbr.rel (0) target = $region21
  $region20: #{tpu_custom_call.1} parent=0 // pred_region
    _
  $region21: #{tpu_custom_call.1} parent=0 // pred_fallthru
    _

</llo_original>
